<compile_context>
chip_gen: v6e
topology: v6e:2x2x1
jax: 0.10.0
libtpu: 0.0.40
codegen_flags: <defaults>
</compile_context>

<pallas_src>
import math
import functools

import jax
import jax.numpy as jnp
from jax.experimental import pallas as pl
from jax.experimental.pallas import tpu as pltpu


def _sgc_kernel(h0_ref, b_ref, adj_ref, o_ref, *, num_layers):
    # adj_ref: (N, N) bf16 (batch dim squeezed);  h0_ref: (N, Cp) bf16 (shared)
    a = adj_ref[...]

    # Propagation: h = A_b @ h, num_layers times. bf16 operands, f32 accumulation.
    h = jnp.dot(a, h0_ref[...], preferred_element_type=jnp.float32)
    for _ in range(num_layers - 1):
        h = jnp.dot(a, h.astype(jnp.bfloat16), preferred_element_type=jnp.float32)

    # Bias + numerically-stable log_softmax over the (padded) channel axis, f32.
    h = h + b_ref[...]                              # (1, Cp) broadcasts over rows
    m = jnp.max(h, axis=-1, keepdims=True)
    l = jnp.sum(jnp.exp(h - m), axis=-1, keepdims=True)
    o_ref[...] = (h - (jnp.log(l) + m)).astype(o_ref.dtype)


def sgc_forward(x, weight, bias, adjs, *, num_layers=2):
    """x: [N, Cin] f32, weight: [Cin, Cout] f32, bias: [Cout] f32, adjs: [B, N, N] f32."""
    assert num_layers >= 1
    N, Cin = x.shape
    Cout = weight.shape[1]
    B = adjs.shape[0]

    # Lane-dense channel padding: Cout -> multiple of 128.  Padded bias gets a
    # large negative so exp() of padded channels is exactly 0 in the softmax.
    Cp = max(128, ((Cout + 127) // 128) * 128)
    pad = Cp - Cout
    w_p = jnp.pad(weight, ((0, 0), (0, pad))) if pad else weight
    b_p = (jnp.concatenate([bias, jnp.full((pad,), -1e30, bias.dtype)])
           if pad else bias).reshape(1, Cp).astype(jnp.float32)

    # bf16 streaming, f32 accumulation (halves HBM bytes for A, the dominant term).
    x_bf = x.astype(jnp.bfloat16)
    w_bf = w_p.astype(jnp.bfloat16)
    a_bf = adjs.astype(jnp.bfloat16)

    # Hoisted shared feature transform: computed once, not once per batch step.
    h0 = jnp.dot(x_bf, w_bf, preferred_element_type=jnp.float32).astype(jnp.bfloat16)

    kernel = functools.partial(_sgc_kernel, num_layers=num_layers)

    cost = pl.CostEstimate(
        flops=2 * B * num_layers * N * N * Cp,
        transcendentals=B * N * (Cp + 1),
        bytes_accessed=B * N * N * 2 + N * Cp * 2 + Cp * 4 + B * N * Cp * 4,
    )
    # Explicit VMEM budget: double-buffered adj + out blocks, resident h0/bias,
    # generous margin; clamped well under v7x's 64 MiB physical VMEM.
    vmem_need = 2 * (N * N * 2 + N * Cp * 4) + N * Cp * 2 + Cp * 4
    vmem_limit = int(min(max(4 * vmem_need, 16 * 2 ** 20), 48 * 2 ** 20))

    out = pl.pallas_call(
        kernel,
        out_shape=jax.ShapeDtypeStruct((B, N, Cp), jnp.float32),
        grid_spec=pltpu.PrefetchScalarGridSpec(
            num_scalar_prefetch=0,
            grid=(B,),
            in_specs=[
                pl.BlockSpec((N, Cp), lambda b: (0, 0)),          # h0 (shared)
                pl.BlockSpec((1, Cp), lambda b: (0, 0)),          # bias (shared)
                pl.BlockSpec((None, N, N), lambda b: (b, 0, 0)),  # adjs[b], squeezed
            ],
            out_specs=pl.BlockSpec((None, N, Cp), lambda b: (b, 0, 0)),
        ),
        compiler_params=pltpu.CompilerParams(
            dimension_semantics=("parallel",),
            vmem_limit_bytes=vmem_limit),
        cost_estimate=cost,
    )(h0, b_p, a_bf)

    # Matches PyTorch: x = x.reshape(-1, x.shape[2]); drop channel padding.
    return out[:, :, :Cout].reshape(B * N, Cout)


def _reference_f32(x, weight, bias, adjs, num_layers):
    # Pure-f32 PyTorch semantics.
    h = x @ weight
    for _ in range(num_layers):
        h = adjs @ h
    h = h.reshape(-1, h.shape[2]) + bias
    return jax.nn.log_softmax(h, axis=1)


def _reference_mixed(x, weight, bias, adjs, num_layers):
    # Same mixed-precision policy as the kernel: bf16 operands, f32 accumulation.
    xb = x.astype(jnp.bfloat16)
    wb = weight.astype(jnp.bfloat16)
    ab = adjs.astype(jnp.bfloat16)
    h = jnp.dot(xb, wb, preferred_element_type=jnp.float32).astype(jnp.bfloat16)
    h = jnp.einsum("bij,jk->bik", ab, h, preferred_element_type=jnp.float32)
    for _ in range(num_layers - 1):
        h = jnp.einsum("bij,bjk->bik", ab, h.astype(jnp.bfloat16),
                       preferred_element_type=jnp.float32)
    h = h.reshape(-1, h.shape[2]) + bias
    return jax.nn.log_softmax(h, axis=1)


if __name__ == "__main__":
    # Small shapes consistent with the module's forward (dense adjs branch).
    N = 16            # number of graph nodes
    Cin = 8           # in_channels
    Cout = 32         # out_channels
    B = 2             # batch of dense adjacency matrices
    NUM_LAYERS = 2

    key = jax.random.PRNGKey(0)
    kx, ka, kw, kb = jax.random.split(key, 4)

    x = jax.random.normal(kx, (N, Cin), dtype=jnp.float32)
    adjs = jax.random.uniform(ka, (B, N, N), dtype=jnp.float32)

    # Deterministic parameter init matching GCNLinear.reset_parameters:
    # stdv = 1/sqrt(in_channels); uniform(-stdv, stdv)
    stdv = 1.0 / math.sqrt(Cin)
    weight = jax.random.uniform(kw, (Cin, Cout), jnp.float32, -stdv, stdv)
    bias = jax.random.uniform(kb, (Cout,), jnp.float32, -stdv, stdv)

    fwd = jax.jit(functools.partial(sgc_forward, num_layers=NUM_LAYERS))
    out = jax.block_until_ready(fwd(x, weight, bias, adjs))

    ref_mixed = _reference_mixed(x, weight, bias, adjs, NUM_LAYERS)
    ref_f32 = _reference_f32(x, weight, bias, adjs, NUM_LAYERS)

    assert out.shape == (B * N, Cout), out.shape
    # Tight check vs. a reference with the identical bf16/f32 precision policy.
    assert jnp.allclose(out, ref_mixed, atol=2e-3, rtol=2e-3), \
        float(jnp.max(jnp.abs(out - ref_mixed)))
    # Loose sanity check vs. pure-f32 semantics (bf16 propagation drift bound).
    assert jnp.allclose(out, ref_f32, atol=5e-1, rtol=0.0), \
        float(jnp.max(jnp.abs(out - ref_f32)))

    print("KERNEL_OK")
</pallas_src>

<mosaic_0001>
module attributes {stable_mosaic.version = 11 : i64} {
  func.func @_sgc_kernel(%arg0: i32, %arg1: memref<16x128xbf16, #tpu.memory_space<vmem>>, %arg2: memref<1x128xf32, #tpu.memory_space<vmem>>, %arg3: memref<1x16x16xbf16, #tpu.memory_space<vmem>>, %arg4: memref<1x16x128xf32, #tpu.memory_space<vmem>>) attributes {dimension_semantics = [#tpu.dimension_semantics<parallel>], iteration_bounds = array<i64: 2>, scalar_prefetch = 0 : i64, scratch_operands = 0 : i64, tpu.core_type = #tpu.core_type<tc>, window_params = [{pipeline_mode = #tpu.pipeline_mode<synchronous>, transform_indices = @transform_0, window_bounds = array<i64: 16, 128>}, {pipeline_mode = #tpu.pipeline_mode<synchronous>, transform_indices = @transform_1, window_bounds = array<i64: 1, 128>}, {transform_indices = @transform_2, window_bounds = array<i64: 1, 16, 16>}, {transform_indices = @transform_3, window_bounds = array<i64: 1, 16, 128>}]} {
    %c0 = arith.constant 0 : index
    %c0_0 = arith.constant 0 : index
    %c0_1 = arith.constant 0 : index
    %0 = vector.load %arg3[%c0, %c0_0, %c0_1] : memref<1x16x16xbf16, #tpu.memory_space<vmem>>, vector<1x16x16xbf16>
    %1 = vector.shape_cast %0 : vector<1x16x16xbf16> to vector<16x16xbf16>
    %c0_2 = arith.constant 0 : index
    %c0_3 = arith.constant 0 : index
    %2 = vector.load %arg1[%c0_2, %c0_3] : memref<16x128xbf16, #tpu.memory_space<vmem>>, vector<16x128xbf16>
    %cst = arith.constant dense<0.000000e+00> : vector<16x128xf32>
    %3 = tpu.matmul %1, %2, %cst {dimension_numbers = #tpu.dot_dimension_numbers<[1], [0], [0], [1], [0, 0, 1, 1], [], []>} : vector<16x16xbf16>, vector<16x128xbf16>, vector<16x128xf32> -> vector<16x128xf32>
    %4 = arith.truncf %3 : vector<16x128xf32> to vector<16x128xbf16>
    %cst_4 = arith.constant dense<0.000000e+00> : vector<16x128xf32>
    %5 = tpu.matmul %1, %4, %cst_4 {dimension_numbers = #tpu.dot_dimension_numbers<[1], [0], [0], [1], [0, 0, 1, 1], [], []>} : vector<16x16xbf16>, vector<16x128xbf16>, vector<16x128xf32> -> vector<16x128xf32>
    %c0_5 = arith.constant 0 : index
    %c0_6 = arith.constant 0 : index
    %6 = vector.load %arg2[%c0_5, %c0_6] : memref<1x128xf32, #tpu.memory_space<vmem>>, vector<1x128xf32>
    %7 = vector.broadcast %6 : vector<1x128xf32> to vector<16x128xf32>
    %8 = arith.addf %5, %7 : vector<16x128xf32>
    %cst_7 = arith.constant dense<0xFF800000> : vector<16xf32>
    %9 = vector.multi_reduction <maximumf>, %8, %cst_7 [1] : vector<16x128xf32> to vector<16xf32>
    %10 = vector.shape_cast %9 : vector<16xf32> to vector<16x1xf32>
    %11 = vector.broadcast %10 : vector<16x1xf32> to vector<16x128xf32>
    %12 = arith.subf %8, %11 : vector<16x128xf32>
    %13 = math.exp %12 : vector<16x128xf32>
    %cst_8 = arith.constant dense<0.000000e+00> : vector<16xf32>
    %14 = vector.multi_reduction <add>, %13, %cst_8 [1] : vector<16x128xf32> to vector<16xf32>
    %15 = vector.shape_cast %14 : vector<16xf32> to vector<16x1xf32>
    %16 = math.log %15 : vector<16x1xf32>
    %17 = arith.addf %16, %10 : vector<16x1xf32>
    %18 = vector.broadcast %17 : vector<16x1xf32> to vector<16x128xf32>
    %19 = arith.subf %8, %18 : vector<16x128xf32>
    %c0_9 = arith.constant 0 : index
    %c0_10 = arith.constant 0 : index
    %c0_11 = arith.constant 0 : index
    %20 = vector.load %arg4[%c0_9, %c0_10, %c0_11] : memref<1x16x128xf32, #tpu.memory_space<vmem>>, vector<1x16x128xf32>
    %21 = vector.shape_cast %20 : vector<1x16x128xf32> to vector<16x128xf32>
    %22 = vector.shape_cast %19 : vector<16x128xf32> to vector<1x16x128xf32>
    tpu.vector_store %arg4[%c0_9, %c0_10, %c0_11], %22 {strides = array<i32>} : memref<1x16x128xf32, #tpu.memory_space<vmem>>, vector<1x16x128xf32>,
    return
  }
  func.func @transform_0(%arg0: i32) -> (i32, i32) {
    %c0_i32 = arith.constant 0 : i32
    %c0_i32_0 = arith.constant 0 : i32
    %c0_i32_1 = arith.constant 0 : i32
    return %c0_i32, %c0_i32_0 : i32, i32
  }
  func.func @transform_1(%arg0: i32) -> (i32, i32) {
    %c0_i32 = arith.constant 0 : i32
    %c0_i32_0 = arith.constant 0 : i32
    %c0_i32_1 = arith.constant 0 : i32
    return %c0_i32, %c0_i32_0 : i32, i32
  }
  func.func @transform_2(%arg0: i32) -> (i32, i32, i32) {
    %c0_i32 = arith.constant 0 : i32
    %c0_i32_0 = arith.constant 0 : i32
    %c0_i32_1 = arith.constant 0 : i32
    return %arg0, %c0_i32, %c0_i32_0 : i32, i32, i32
  }
  func.func @transform_3(%arg0: i32) -> (i32, i32, i32) {
    %c0_i32 = arith.constant 0 : i32
    %c0_i32_0 = arith.constant 0 : i32
    %c0_i32_1 = arith.constant 0 : i32
    return %arg0, %c0_i32, %c0_i32_0 : i32, i32, i32
  }
}

</mosaic_0001>

<llo_original>
// kernel: sgc_forward.1
$region0: #{sgc_forward.1}
  #allocation0 [shape = 'u32[]', space=smem, size = 0x4, offset = 0x4, fixed_abs, tag = 'smem constant byte address 0x4 - core index']
  #allocation1 [shape = 'u32[144,128]{1,0:T(1,128)}', space=vmem, size = 0x12000, scoped, tag = 'internal scratch']
  %s0 = inlined_call_operand.vmem [shape: bf16[16,128], index: 0, kind: input, shape index: {}]
  %s1 = inlined_call_operand.vmem [shape: f32[1,128], index: 1, kind: input, shape index: {}]
  %s2 = inlined_call_operand.vmem [shape: bf16[2,16,16], index: 2, kind: input, shape index: {}]
  %s3 = inlined_call_operand.hbm [shape: f32[2,16,128], index: 3, kind: output, shape index: {}]
  %s4 = sld [smem:[#allocation0]]
  $region45: #{sgc_forward.1} parent=0
    _
  %s6 = ssub.s32 1, %s4
  %s7 = scalar_select 0, %s6, %s4
  $region1: #{sgc_forward.1} parent=0
    #allocation2 [shape = 'u8[16384]{0}', space=vmem, size = 0x4000, scoped, tag = 'output window, operand 0']
    #allocation3 [shape = 's32[2]{0}', space=sflag, size = 0x8, scoped, tag = 'scoped memory for sgc_forward.1']
    %8 = vsyncpa [#allocation3], 0
    %s9 = scalar_lea.sflag [#allocation3], 1
    %10 = vsyncpa %s9, 0
    loop: start=0, step=1, limit=4
    $region2: #{sgc_forward.1} parent=1 // loop_pre_header
      _
    $region3: #{sgc_forward.1} parent=1 // loop_header
      %s12 = sphi 0, %s16
      %p13 = scmp.ge.s32.totalorder %s12, 4
      %s20 = sphi 0, %s20
      %s22 = sphi 0, %s20
      %s23 = sphi 0, %s22
      %s37 = sphi 0, %s23
      %s41 = sphi 0, %s41
      %s43 = sphi 0, %s41
      %s44 = sphi 0, %s43
      %s58 = sphi 0, %s44
      %s64 = sphi 0, %s66
      %s67 = sphi 0, %s64
      %s68 = sphi 0, %s67
      %s84 = sphi 0, %s68
      %s90 = sphi 0, %s92
      %s93 = sphi 0, %s90
      %s94 = sphi 0, %s93
      %s110 = sphi 0, %s94
    $region4: #{sgc_forward.1} parent=1 // loop_header_branch
      %15 = sbr.rel (%p13) target = $region8
    $region5: #{sgc_forward.1} parent=1 // loop_body
      %s17 = ssub.s32 %s12, 1
      %s18 = ssub.s32 %s12, 2
      %s19 = sadd.s32 %s12, 1
      %s21 = sadd.s32 %s20, 1
      %p24 = scmp.eq.s32.totalorder %s12, 1
      %p25 = scmp.ne.s32.totalorder %s20, %s22
      %p26 = scmp.eq.s32.totalorder %s12, 0
      %p27 = por %p25, %p26
      %p28 = scmp.ne.s32.totalorder %s20, %s22
      %p29 = scmp.eq.s32.totalorder %s17, 1
      %p30 = por %p28, %p29
      %p31 = scmp.ne.s32.totalorder %s22, %s23
      %p32 = scmp.eq.s32.totalorder %s17, 0
      %p33 = por %p31, %p32
      %p34 = scmp.ne.s32.totalorder %s22, %s23
      %p35 = scmp.eq.s32.totalorder %s18, 1
      %p36 = por %p34, %p35
      %p38 = scmp.ne.s32.totalorder %s23, %s37
      %p39 = scmp.eq.s32.totalorder %s18, 0
      %p40 = por %p38, %p39
      %s42 = sadd.s32 %s41, 1
      %p45 = scmp.eq.s32.totalorder %s12, 1
      %p46 = scmp.ne.s32.totalorder %s41, %s43
      %p47 = scmp.eq.s32.totalorder %s12, 0
      %p48 = por %p46, %p47
      %p49 = scmp.ne.s32.totalorder %s41, %s43
      %p50 = scmp.eq.s32.totalorder %s17, 1
      %p51 = por %p49, %p50
      %p52 = scmp.ne.s32.totalorder %s43, %s44
      %p53 = scmp.eq.s32.totalorder %s17, 0
      %p54 = por %p52, %p53
      %p55 = scmp.ne.s32.totalorder %s43, %s44
      %p56 = scmp.eq.s32.totalorder %s18, 1
      %p57 = por %p55, %p56
      %p59 = scmp.ne.s32.totalorder %s44, %s58
      %p60 = scmp.eq.s32.totalorder %s18, 0
      %p61 = por %p59, %p60
      %s62 = ssub.s32 %s12, %s19
      %p63 = scmp.eq.s32.totalorder %s62, 0
      %s65 = sadd.s32 %s64, 1
      %s66 = scalar_select %p63, %s64, %s65
      %p69 = pneg %p63
      %p70 = scmp.eq.s32.totalorder %s12, 1
      %p71 = por %p69, %p70
      %p72 = scmp.ne.s32.totalorder %s64, %s67
      %p73 = scmp.eq.s32.totalorder %s12, 0
      %p74 = por %p72, %p73
      %p75 = scmp.ne.s32.totalorder %s64, %s67
      %p76 = scmp.eq.s32.totalorder %s17, 1
      %p77 = por %p75, %p76
      %p78 = scmp.ne.s32.totalorder %s67, %s68
      %p79 = scmp.eq.s32.totalorder %s17, 0
      %p80 = por %p78, %p79
      %p81 = scmp.ne.s32.totalorder %s67, %s68
      %p82 = scmp.eq.s32.totalorder %s18, 1
      %p83 = por %p81, %p82
      %p85 = scmp.ne.s32.totalorder %s68, %s84
      %p86 = scmp.eq.s32.totalorder %s18, 0
      %p87 = por %p85, %p86
      %s88 = ssub.s32 %s12, %s19
      %p89 = scmp.eq.s32.totalorder %s88, 0
      %s91 = sadd.s32 %s90, 1
      %s92 = scalar_select %p89, %s90, %s91
      %p95 = pneg %p89
      %p96 = scmp.eq.s32.totalorder %s12, 1
      %p97 = por %p95, %p96
      %p98 = scmp.ne.s32.totalorder %s90, %s93
      %p99 = scmp.eq.s32.totalorder %s12, 0
      %p100 = por %p98, %p99
      %p101 = scmp.ne.s32.totalorder %s90, %s93
      %p102 = scmp.eq.s32.totalorder %s17, 1
      %p103 = por %p101, %p102
      %p104 = scmp.ne.s32.totalorder %s93, %s94
      %p105 = scmp.eq.s32.totalorder %s17, 0
      %p106 = por %p104, %p105
      %p107 = scmp.ne.s32.totalorder %s93, %s94
      %p108 = scmp.eq.s32.totalorder %s18, 1
      %p109 = por %p107, %p108
      %p111 = scmp.ne.s32.totalorder %s94, %s110
      %p112 = scmp.eq.s32.totalorder %s18, 0
      %p113 = por %p111, %p112
      %p114 = scmp.le.s32.totalorder 1, %s12
      %p115 = scmp.lt.s32.totalorder %s12, 3
      %p116 = pnand %p114, %p115
      %p117 = pneg %p116
      // Predicated region
      $region9: #{sgc_forward.1} parent=5 // pred_check
        _
      $region10: #{sgc_forward.1} parent=5 // pred_check_branch
        %119 = sbr.rel (%p116) target = $region12
      $region11: #{sgc_forward.1} parent=5 // pred_region
        %s120 = ssub.s32 %s12, 1
        // Predicated region
        $region13: #{sgc_forward.1} parent=11 // pred_check
          %p121 = pneg %p33
        $region14: #{sgc_forward.1} parent=11 // pred_check_branch
          %123 = sbr.rel (%p121) target = $region16
        $region15: #{sgc_forward.1} parent=11 // pred_region
          _
        $region16: #{sgc_forward.1} parent=11 // pred_fallthru
          _
        // Predicated region
        $region17: #{sgc_forward.1} parent=11 // pred_check
          %p124 = pneg %p54
        $region18: #{sgc_forward.1} parent=11 // pred_check_branch
          %126 = sbr.rel (%p124) target = $region20
        $region19: #{sgc_forward.1} parent=11 // pred_region
          _
        $region20: #{sgc_forward.1} parent=11 // pred_fallthru
          _
      $region12: #{sgc_forward.1} parent=5 // pred_fallthru
        _
      %p127 = scmp.lt.s32.totalorder %s12, 2
      // Predicated region
      $region21: #{sgc_forward.1} parent=5 // pred_check
        %p128 = pneg %p127
      $region22: #{sgc_forward.1} parent=5 // pred_check_branch
        %130 = sbr.rel (%p128) target = $region24
      $region23: #{sgc_forward.1} parent=5 // pred_region
        // Predicated region
        $region25: #{sgc_forward.1} parent=23 // pred_check
          %p131 = pneg %p74
        $region26: #{sgc_forward.1} parent=23 // pred_check_branch
          %133 = sbr.rel (%p131) target = $region28
        $region27: #{sgc_forward.1} parent=23 // pred_region
          %p134 = scmp.lt.s32.totalorder %s12, 1
          %s135 = scalar_select %p134, %s12, 1
          %s136 = smul.addr %s135, 2
          %s137 = smul.addr %s136, 4
          %s138 = scalar_lea.vmem %s2, %s137
        $region28: #{sgc_forward.1} parent=23 // pred_fallthru
          _
      $region24: #{sgc_forward.1} parent=5 // pred_fallthru
        _
      %p139 = scmp.le.s32.totalorder 1, %s12
      %p140 = scmp.lt.s32.totalorder %s12, 3
      %p141 = pnand %p139, %p140
      %p142 = pneg %p141
      // Predicated region
      $region29: #{sgc_forward.1} parent=5 // pred_check
        _
      $region30: #{sgc_forward.1} parent=5 // pred_check_branch
        %144 = sbr.rel (%p141) target = $region32
      $region31: #{sgc_forward.1} parent=5 // pred_region
        %s145 = ssub.s32 %s12, 1
        %p146 = pneg %p33
        %p147 = pneg %p30
        %p148 = pneg %p54
        %p149 = pneg %p51
        %p150 = scmp.lt.s32.totalorder %s17, 1
        %s151 = scalar_select %p150, %s17, 1
        %s152 = smul.addr %s151, 2
        %s153 = smul.addr %s152, 4
        %s154 = scalar_lea.vmem %s2, %s153
        %p155 = pneg %p80
        %p156 = pneg %p77
        %p157 = pneg %p106
        %p158 = pneg %p103
        %s159 = sand.u32 %s93, 1
        %s160 = scalar_lea.sflag [#allocation3], %s159
        %s161 = sand.u32 %s93, 1
        %s162 = smul.addr %s161, 16
        %s163 = scalar_lea.vmem [#allocation2], %s162
        %p164 = scmp.lt.s32.totalorder %s17, 1
        %s165 = scalar_select %p164, %s17, 1
        %s166 = smul.addr %s165, 2
        %s167 = smul.addr %s166, 4
        %s168 = scalar_lea.vmem %s2, %s167
        %v170 = vld [vmem:[%s168] sm:$0xf]
        %v171 = vld [vmem:[%s168 + $0x4] sm:$0xf]
        %v172 = vld [vmem:[%s0] sm:$0xf]
        %v173 = vld [vmem:[%s0 + $0x4] sm:$0xf]
        %v176 = vunpack.c.l.b16 %v170
        %v177 = vunpack.c.l.b16 %v171
        %v178 = vpack.c.b16 %v177, %v176
        %v181 = vunpack.c.l.b16 %v172
        %v182 = vunpack.c.l.b16 %v173
        %v183 = vpack.c.b16 %v182, %v181
        %vm185 = vcmask 130048
        %v187 = vsel %vm185, %v178, 0
        %189 = vmatprep.subr.bf16.mxu0 0
        %190 = vmatpush1.bf16.msra.mxu0 0
        %191 = vmatprep.subr.bf16.mxu0 0
        %192 = vmatpush1.bf16.msra.mxu0 0
        %193 = vmatprep.subr.bf16.mxu0 0
        %194 = vmatpush1.bf16.msra.mxu0 0
        %195 = vmatprep.subr.bf16.mxu0 0
        %196 = vmatpush1.bf16.msra.mxu0 0
        %197 = vmatprep.subr.bf16.mxu0 0
        %198 = vmatpush1.bf16.msra.mxu0 0
        %199 = vmatprep.subr.bf16.mxu0 0
        %200 = vmatpush1.bf16.msra.mxu0 0
        %201 = vmatprep.subr.bf16.mxu0 0
        %202 = vmatpush1.bf16.msra.mxu0 0
        %203 = vmatprep.subr.bf16.mxu0 0
        %204 = vmatpush1.bf16.msra.mxu0 %v183
        %205 = vmatprep.subr.bf16.mxu0 0
        %206 = vmatpush2.bf16.msra.mxu0 0
        %207 = vmatprep.subr.bf16.mxu0 0
        %208 = vmatpush2.bf16.msra.mxu0 0
        %209 = vmatprep.subr.bf16.mxu0 0
        %210 = vmatpush2.bf16.msra.mxu0 0
        %211 = vmatprep.subr.bf16.mxu0 0
        %212 = vmatpush2.bf16.msra.mxu0 0
        %213 = vmatprep.subr.bf16.mxu0 0
        %214 = vmatpush2.bf16.msra.mxu0 0
        %215 = vmatprep.subr.bf16.mxu0 0
        %216 = vmatpush2.bf16.msra.mxu0 0
        %217 = vmatprep.subr.bf16.mxu0 0
        %218 = vmatpush2.bf16.msra.mxu0 0
        %219 = vmatprep.subr.bf16.mxu0 0
        %220 = vmatpush2.bf16.msra.mxu0 0
        %221 = vmatprep.mubr.bf16.mxu0 0
        %222 = vmatmul.mubr.bf16.gmra.mxu0 %v187
        %v223 = vpop.f32.mrf.mxu0
        %v224 = vadd.f32 0.0, %v223
        %v225 = vpop.f32.mrf.mxu0
        %v226 = vpop.f32.mrf.mxu0
        %v227 = vadd.f32 0.0, %v226
        %v228 = vpop.f32.mrf.mxu0
        %229 = vdwg.mxu0
        %v230 = vpack.c.bf16 %v227, %v224
        %v231 = vld [vmem:[%s1] sm:$0x1]
        %v233 = vlaneseq
        %v234 = vshrl.u32 %v233, 7
        %v235 = vsub.s32 0, %v234
        %v236 = vrot.slane %v231, %v235
        %238 = vmatprep.subr.bf16.mxu0 0
        %239 = vmatpush1.bf16.msra.mxu0 0
        %240 = vmatprep.subr.bf16.mxu0 0
        %241 = vmatpush1.bf16.msra.mxu0 0
        %242 = vmatprep.subr.bf16.mxu0 0
        %243 = vmatpush1.bf16.msra.mxu0 0
        %244 = vmatprep.subr.bf16.mxu0 0
        %245 = vmatpush1.bf16.msra.mxu0 0
        %246 = vmatprep.subr.bf16.mxu0 0
        %247 = vmatpush1.bf16.msra.mxu0 0
        %248 = vmatprep.subr.bf16.mxu0 0
        %249 = vmatpush1.bf16.msra.mxu0 0
        %250 = vmatprep.subr.bf16.mxu0 0
        %251 = vmatpush1.bf16.msra.mxu0 0
        %252 = vmatprep.subr.bf16.mxu0 0
        %253 = vmatpush1.bf16.msra.mxu0 %v230
        %254 = vmatprep.subr.bf16.mxu0 0
        %255 = vmatpush2.bf16.msra.mxu0 0
        %256 = vmatprep.subr.bf16.mxu0 0
        %257 = vmatpush2.bf16.msra.mxu0 0
        %258 = vmatprep.subr.bf16.mxu0 0
        %259 = vmatpush2.bf16.msra.mxu0 0
        %260 = vmatprep.subr.bf16.mxu0 0
        %261 = vmatpush2.bf16.msra.mxu0 0
        %262 = vmatprep.subr.bf16.mxu0 0
        %263 = vmatpush2.bf16.msra.mxu0 0
        %264 = vmatprep.subr.bf16.mxu0 0
        %265 = vmatpush2.bf16.msra.mxu0 0
        %266 = vmatprep.subr.bf16.mxu0 0
        %267 = vmatpush2.bf16.msra.mxu0 0
        %268 = vmatprep.subr.bf16.mxu0 0
        %269 = vmatpush2.bf16.msra.mxu0 0
        %270 = vmatprep.mubr.bf16.mxu0 0
        %271 = vmatmul.mubr.bf16.gmra.mxu0 %v187
        %v272 = vpop.f32.mrf.mxu0
        %v273 = vadd.f32 %v236, %v272
        %v274 = vpop.f32.mrf.mxu0
        %v275 = vpop.f32.mrf.mxu0
        %v276 = vadd.f32 %v236, %v275
        %v277 = vpop.f32.mrf.mxu0
        %278 = vdwg.mxu0
        %279 = vmax.xlane.f32.xlu0 %v273
        %v280 = vpop.xlane.xlu0 %279
        %281 = vmax.xlane.f32.xlu0 %v276
        %v282 = vpop.xlane.xlu0 %281
        %v283 = vsub.f32 %v273, %v280
        %v284 = vsub.f32 %v276, %v282
        %v285 = vmul.f32 %v283, 1.442695
        %v286 = vpow.pop %v285
        %v287 = vmul.f32 %v284, 1.442695
        %v288 = vpow.pop %v287
        %289 = vadd.xlane.f32.xlu0 %v286
        %v290 = vpop.xlane.xlu0 %289
        %291 = vadd.xlane.f32.xlu0 %v288
        %v292 = vpop.xlane.xlu0 %291
        %v293 = vlog2.pop %v290
        %v294 = vmul.f32 %v293, 0.6931472
        %v295 = vlog2.pop %v292
        %v296 = vmul.f32 %v295, 0.6931472
        %v297 = vadd.f32 %v294, %v280
        %v298 = vadd.f32 %v296, %v282
        %v299 = vsub.f32 %v273, %v297
        %v300 = vsub.f32 %v276, %v298
        %301 = vst [vmem:[%s163] sm:$0xff] %v299
        %302 = vst [vmem:[%s163 + $0x8] sm:$0xff] %v300
        %s303 = sand.u32 %s93, 1
        %s304 = scalar_lea.sflag [#allocation3], %s303
        %s305 = sand.u32 %s93, 1
        %s306 = smul.addr %s305, 16
        %s307 = scalar_lea.vmem [#allocation2], %s306
        // Predicated region
        $region33: #{sgc_forward.1} parent=31 // pred_check
          %p308 = pneg %p103
        $region34: #{sgc_forward.1} parent=31 // pred_check_branch
          %310 = sbr.rel (%p308) target = $region36
        $region35: #{sgc_forward.1} parent=31 // pred_region
          %s312 = ssub.s32 256, 256
          %313 = vsyncadd %s304, %s312
          %s314 = smul.addr %s17, 2
          %s315 = smul.addr %s314, 128
          %s316 = scalar_lea.hbm %s3, %s315
          %s317 = sshll.u32 %s307, 4
          %s318 = int_to_ptr.vmem [resolvable:$true] %s317
          %323 = dma.vmem_to_hbm [thread:$0]  %s318, 256, %s316, %s304, 128, 128, 8
        $region36: #{sgc_forward.1} parent=31 // pred_fallthru
          _
      $region32: #{sgc_forward.1} parent=5 // pred_fallthru
        _
      %p324 = scmp.le.s32.totalorder 2, %s12
      // Predicated region
      $region37: #{sgc_forward.1} parent=5 // pred_check
        %p325 = pneg %p324
      $region38: #{sgc_forward.1} parent=5 // pred_check_branch
        %327 = sbr.rel (%p325) target = $region40
      $region39: #{sgc_forward.1} parent=5 // pred_region
        %s328 = ssub.s32 %s12, 2
        // Predicated region
        $region41: #{sgc_forward.1} parent=39 // pred_check
          %p329 = pneg %p109
        $region42: #{sgc_forward.1} parent=39 // pred_check_branch
          %331 = sbr.rel (%p329) target = $region44
        $region43: #{sgc_forward.1} parent=39 // pred_region
          %s332 = sand.u32 %s94, 1
          %s333 = scalar_lea.sflag [#allocation3], %s332
          %s334 = sand.u32 %s94, 1
          %s335 = smul.addr %s334, 16
          %s336 = scalar_lea.vmem [#allocation2], %s335
          %337 = dma.done %s333, 256
        $region44: #{sgc_forward.1} parent=39 // pred_fallthru
          _
      $region40: #{sgc_forward.1} parent=5 // pred_fallthru
        _
    $region6: #{sgc_forward.1} parent=1 // loop_footer
      %s16 = sadd.s32 1, %s12
    $region7: #{sgc_forward.1} parent=1 // loop_footer_branch
      %11 = sbr.rel target = $region3
    $region8: #{sgc_forward.1} parent=1 // loop_exit
      _
    %338 = vsyncpa [#allocation3], 1
    %s339 = scalar_lea.sflag [#allocation3], 1
    %340 = vsyncpa %s339, 1

</llo_original>
